<compile_context>
chip_gen: v5e
topology: v5e:2x2
jax: 0.10.0
libtpu: 0.0.40
codegen_flags: <defaults>
</compile_context>

<pallas_src>
import functools

import jax
import jax.numpy as jnp
from jax.experimental import pallas as pl
from jax.experimental.pallas import tpu as pltpu


def _pixel_dropout_kernel(bits_ref, x_ref, o_ref, *, threshold):
    # bits_ref: (1, 1, T) uint32  -- one spatial mask per image, shared by channels.
    # x_ref/o_ref: (1, C, T) in the image's storage dtype.
    drop = bits_ref[...] < jnp.uint32(threshold)            # integer-domain compare
    x = x_ref[...]
    o_ref[...] = jnp.where(drop, jnp.zeros((), dtype=x.dtype), x)


def pixel_dropout(img, key, dropout_prob=0.1, apply_dropout=False,
                  tile_hw=64 * 1024):
    """JAX/Pallas equivalent of PixelDropout.forward.

    img: (C, H, W) or (N, C, H, W) array (any storage dtype).
    key: jax PRNG key (stand-in for torch's global RNG state).
    """
    if not apply_dropout:
        return img

    squeeze = (img.ndim == 3)
    if squeeze:
        img = img[None]
    N, C, H, W = img.shape
    HW = H * W

    x = img.reshape(N, C, HW)                      # lane-dense spatial axis
    # One (H*W,) draw per image, broadcast across channels (== rand_like(img[0])).
    bits = jax.random.bits(key, (N, 1, HW), dtype=jnp.uint32)

    # drop iff uniform < p  <=>  bits < p * 2^32  (exact to ~2^-32 granularity).
    threshold = min(max(int(round(dropout_prob * (1 << 32))), 0), (1 << 32) - 1)

    # Spatial tile: full extent, or a multiple of 128 lanes. Sized so that
    # (in + out + bits) * 2 buffers stays well under v7x's 32 MiB scoped VMEM.
    T = HW if HW <= tile_hw else tile_hw           # tile_hw is a multiple of 128
    grid = (N, pl.cdiv(HW, T))

    kernel = functools.partial(_pixel_dropout_kernel, threshold=threshold)
    out = pl.pallas_call(
        kernel,
        out_shape=jax.ShapeDtypeStruct((N, C, HW), img.dtype),
        grid=grid,
        in_specs=[
            pl.BlockSpec((1, 1, T), lambda n, j: (n, 0, j)),   # mask bits
            pl.BlockSpec((1, C, T), lambda n, j: (n, 0, j)),   # image
        ],
        out_specs=pl.BlockSpec((1, C, T), lambda n, j: (n, 0, j)),
        compiler_params=pltpu.CompilerParams(
            dimension_semantics=("parallel", "parallel"),
        ),
    )(bits, x)

    out = out.reshape(N, C, H, W)
    return out[0] if squeeze else out


if __name__ == "__main__":
    root = jax.random.PRNGKey(0)
    data_key, mask_key = jax.random.split(root)

    N, C, H, W = 2, 4, 16, 16
    p = 0.25
    img = jax.random.normal(data_key, (N, C, H, W), dtype=jnp.float32)

    # apply_dropout=False path: identity (matches the module's default).
    out_identity = pixel_dropout(img, mask_key, dropout_prob=p, apply_dropout=False)
    assert out_identity is img

    # apply_dropout=True path: run the Pallas kernel.
    out = pixel_dropout(img, mask_key, dropout_prob=p, apply_dropout=True)
    out = jax.block_until_ready(out)

    # Exact reference: same bits / same threshold, computed in pure jnp.
    HW = H * W
    bits = jax.random.bits(mask_key, (N, 1, HW), dtype=jnp.uint32)
    threshold = min(max(int(round(p * (1 << 32))), 0), (1 << 32) - 1)
    drop = (bits < jnp.uint32(threshold)).reshape(N, 1, H, W)
    ref = jnp.where(drop, jnp.zeros((), img.dtype), img)
    assert jnp.array_equal(out, ref), "kernel output differs from reference"

    # Structural checks: each element is 0 or the original value, and the
    # dropout pattern is identical across channels of the same image.
    out_np = jax.device_get(out)
    img_np = jax.device_get(img)
    zeroed = out_np == 0.0
    assert ((out_np == img_np) | zeroed).all()
    for n in range(N):
        ch0 = zeroed[n, 0]
        for c in range(1, C):
            assert ((zeroed[n, c] == ch0) | (img_np[n, c] == 0.0)).all()

    print("KERNEL_OK")
</pallas_src>

<mosaic_0001>
module attributes {stable_mosaic.version = 11 : i64} {
  func.func @_pixel_dropout_kernel(%arg0: i32, %arg1: i32, %arg2: memref<1x1x256xi32, #tpu.memory_space<vmem>>, %arg3: memref<1x4x256xf32, #tpu.memory_space<vmem>>, %arg4: memref<1x4x256xf32, #tpu.memory_space<vmem>>) attributes {dimension_semantics = [#tpu.dimension_semantics<parallel>, #tpu.dimension_semantics<parallel>], iteration_bounds = array<i64: 2, 1>, scalar_prefetch = 0 : i64, scratch_operands = 0 : i64, tpu.core_type = #tpu.core_type<tc>, window_params = [{transform_indices = @transform_0, window_bounds = array<i64: 1, 1, 256>}, {transform_indices = @transform_1, window_bounds = array<i64: 1, 4, 256>}, {transform_indices = @transform_2, window_bounds = array<i64: 1, 4, 256>}]} {
    %c0 = arith.constant 0 : index
    %c0_0 = arith.constant 0 : index
    %c0_1 = arith.constant 0 : index
    %0 = vector.load %arg2[%c0, %c0_0, %c0_1] : memref<1x1x256xi32, #tpu.memory_space<vmem>>, vector<1x1x256xi32>
    %c1073741824_i32 = arith.constant 1073741824 : i32
    %1 = vector.broadcast %c1073741824_i32 : i32 to vector<1x1x256xi32>
    %2 = arith.cmpi ult, %0, %1 : vector<1x1x256xi32>
    %c0_2 = arith.constant 0 : index
    %c0_3 = arith.constant 0 : index
    %c0_4 = arith.constant 0 : index
    %3 = vector.load %arg3[%c0_2, %c0_3, %c0_4] : memref<1x4x256xf32, #tpu.memory_space<vmem>>, vector<1x4x256xf32>
    %cst = arith.constant 0.000000e+00 : f32
    %4 = vector.shape_cast %2 : vector<1x1x256xi1> to vector<1x1x256xi1>
    %5 = vector.broadcast %4 : vector<1x1x256xi1> to vector<1x4x256xi1>
    %6 = vector.broadcast %cst : f32 to vector<1x4x256xf32>
    %7 = arith.select %5, %6, %3 : vector<1x4x256xi1>, vector<1x4x256xf32>
    %c0_5 = arith.constant 0 : index
    %c0_6 = arith.constant 0 : index
    %c0_7 = arith.constant 0 : index
    %8 = vector.load %arg4[%c0_5, %c0_6, %c0_7] : memref<1x4x256xf32, #tpu.memory_space<vmem>>, vector<1x4x256xf32>
    tpu.vector_store %arg4[%c0_5, %c0_6, %c0_7], %7 {strides = array<i32>} : memref<1x4x256xf32, #tpu.memory_space<vmem>>, vector<1x4x256xf32>,
    return
  }
  func.func @transform_0(%arg0: i32, %arg1: i32) -> (i32, i32, i32) {
    %c0_i32 = arith.constant 0 : i32
    %c0_i32_0 = arith.constant 0 : i32
    return %arg0, %c0_i32, %arg1 : i32, i32, i32
  }
  func.func @transform_1(%arg0: i32, %arg1: i32) -> (i32, i32, i32) {
    %c0_i32 = arith.constant 0 : i32
    %c0_i32_0 = arith.constant 0 : i32
    return %arg0, %c0_i32, %arg1 : i32, i32, i32
  }
  func.func @transform_2(%arg0: i32, %arg1: i32) -> (i32, i32, i32) {
    %c0_i32 = arith.constant 0 : i32
    %c0_i32_0 = arith.constant 0 : i32
    return %arg0, %c0_i32, %arg1 : i32, i32, i32
  }
}

</mosaic_0001>

<llo_original>
// kernel: tpu_custom_call.1
$region0: #{tpu_custom_call.1}
  #allocation0 [shape = 'u32[]', space=smem, size = 0x4, offset = 0x4, fixed_abs, tag = 'smem constant byte address 0x4 - core index']
  #allocation1 [shape = 'u32[72,128]{1,0:T(1,128)}', space=vmem, size = 0x9000, scoped, tag = 'internal scratch']
  %s0 = inlined_call_operand.hbm [shape: u32[2,1,256], index: 0, kind: input, shape index: {}]
  %s1 = inlined_call_operand.hbm [shape: f32[2,4,256], index: 1, kind: input, shape index: {}]
  %s2 = inlined_call_operand.hbm [shape: f32[2,4,256], index: 2, kind: output, shape index: {}]
  %s3 = sld [smem:[#allocation0]]
  $region49: #{tpu_custom_call.1} parent=0
    _
  %s5 = ssub.s32 1, %s3
  %s6 = scalar_select 0, %s5, %s3
  $region1: #{tpu_custom_call.1} parent=0
    #allocation2 [shape = 'u8[2048]{0}', space=vmem, size = 0x800, scoped, tag = 'input window, operand 0']
    #allocation3 [shape = 's32[2]{0}', space=sflag, size = 0x8, scoped, tag = 'scoped memory for tpu_custom_call.1']
    #allocation4 [shape = 's32[2]{0}', space=sflag, size = 0x8, scoped, tag = 'scoped memory for tpu_custom_call.1']
    #allocation5 [shape = 'u8[8192]{0}', space=vmem, size = 0x2000, scoped, tag = 'input window, operand 1']
    #allocation6 [shape = 's32[2]{0}', space=sflag, size = 0x8, scoped, tag = 'scoped memory for tpu_custom_call.1']
    #allocation7 [shape = 'u8[8192]{0}', space=vmem, size = 0x2000, scoped, tag = 'output window, operand 0']
    %7 = vsyncpa [#allocation3], 0
    %s8 = scalar_lea.sflag [#allocation3], 1
    %9 = vsyncpa %s8, 0
    %10 = vsyncpa [#allocation6], 0
    %s11 = scalar_lea.sflag [#allocation6], 1
    %12 = vsyncpa %s11, 0
    %13 = vsyncpa [#allocation4], 0
    %s14 = scalar_lea.sflag [#allocation4], 1
    %15 = vsyncpa %s14, 0
    loop: start=0, step=1, limit=4
    $region2: #{tpu_custom_call.1} parent=1 // loop_pre_header
      _
    $region3: #{tpu_custom_call.1} parent=1 // loop_header
      %s17 = sphi 0, %s21
      %p18 = scmp.ge.s32.totalorder %s17, 4
      %s24 = sphi 0, %s36
      %s25 = sphi 0, %s32
      %s26 = sphi 0, %s24
      %s27 = sphi 0, %s25
      %s28 = sphi 0, %s26
      %s29 = sphi 0, %s27
      %s41 = sphi 0, %s43
      %s44 = sphi 0, %s41
      %s45 = sphi 0, %s44
      %s61 = sphi 0, %s45
      %s69 = sphi 0, %s71
      %s72 = sphi 0, %s69
      %s73 = sphi 0, %s72
      %s89 = sphi 0, %s73
      %s97 = sphi 0, %s99
      %s100 = sphi 0, %s97
      %s101 = sphi 0, %s100
      %s117 = sphi 0, %s101
    $region4: #{tpu_custom_call.1} parent=1 // loop_header_branch
      %20 = sbr.rel (%p18) target = $region8
    $region5: #{tpu_custom_call.1} parent=1 // loop_body
      %s22 = ssub.s32 %s17, 1
      %s23 = ssub.s32 %s17, 2
      %s30 = sadd.s32 1, %s25
      %p31 = scmp.ge.s32.totalorder %s30, 1
      %s32 = scalar_select %p31, 0, %s30
      %s33 = sadd.s32 1, %s24
      %s34 = scalar_select %p31, %s33, %s24
      %p35 = scmp.ge.s32.totalorder %s34, 2
      %s36 = scalar_select %p35, 0, %s34
      %s37 = ssub.s32 %s24, %s36
      %s38 = ssub.s32 %s25, %s32
      %s39 = sor.u32 %s37, %s38
      %p40 = scmp.eq.s32.totalorder %s39, 0
      %s42 = sadd.s32 %s41, 1
      %s43 = scalar_select %p40, %s41, %s42
      %p46 = pneg %p40
      %p47 = scmp.eq.s32.totalorder %s17, 1
      %p48 = por %p46, %p47
      %p49 = scmp.ne.s32.totalorder %s41, %s44
      %p50 = scmp.eq.s32.totalorder %s17, 0
      %p51 = por %p49, %p50
      %p52 = scmp.ne.s32.totalorder %s41, %s44
      %p53 = scmp.eq.s32.totalorder %s22, 1
      %p54 = por %p52, %p53
      %p55 = scmp.ne.s32.totalorder %s44, %s45
      %p56 = scmp.eq.s32.totalorder %s22, 0
      %p57 = por %p55, %p56
      %p58 = scmp.ne.s32.totalorder %s44, %s45
      %p59 = scmp.eq.s32.totalorder %s23, 1
      %p60 = por %p58, %p59
      %p62 = scmp.ne.s32.totalorder %s45, %s61
      %p63 = scmp.eq.s32.totalorder %s23, 0
      %p64 = por %p62, %p63
      %s65 = ssub.s32 %s24, %s36
      %s66 = ssub.s32 %s25, %s32
      %s67 = sor.u32 %s65, %s66
      %p68 = scmp.eq.s32.totalorder %s67, 0
      %s70 = sadd.s32 %s69, 1
      %s71 = scalar_select %p68, %s69, %s70
      %p74 = pneg %p68
      %p75 = scmp.eq.s32.totalorder %s17, 1
      %p76 = por %p74, %p75
      %p77 = scmp.ne.s32.totalorder %s69, %s72
      %p78 = scmp.eq.s32.totalorder %s17, 0
      %p79 = por %p77, %p78
      %p80 = scmp.ne.s32.totalorder %s69, %s72
      %p81 = scmp.eq.s32.totalorder %s22, 1
      %p82 = por %p80, %p81
      %p83 = scmp.ne.s32.totalorder %s72, %s73
      %p84 = scmp.eq.s32.totalorder %s22, 0
      %p85 = por %p83, %p84
      %p86 = scmp.ne.s32.totalorder %s72, %s73
      %p87 = scmp.eq.s32.totalorder %s23, 1
      %p88 = por %p86, %p87
      %p90 = scmp.ne.s32.totalorder %s73, %s89
      %p91 = scmp.eq.s32.totalorder %s23, 0
      %p92 = por %p90, %p91
      %s93 = ssub.s32 %s24, %s36
      %s94 = ssub.s32 %s25, %s32
      %s95 = sor.u32 %s93, %s94
      %p96 = scmp.eq.s32.totalorder %s95, 0
      %s98 = sadd.s32 %s97, 1
      %s99 = scalar_select %p96, %s97, %s98
      %p102 = pneg %p96
      %p103 = scmp.eq.s32.totalorder %s17, 1
      %p104 = por %p102, %p103
      %p105 = scmp.ne.s32.totalorder %s97, %s100
      %p106 = scmp.eq.s32.totalorder %s17, 0
      %p107 = por %p105, %p106
      %p108 = scmp.ne.s32.totalorder %s97, %s100
      %p109 = scmp.eq.s32.totalorder %s22, 1
      %p110 = por %p108, %p109
      %p111 = scmp.ne.s32.totalorder %s100, %s101
      %p112 = scmp.eq.s32.totalorder %s22, 0
      %p113 = por %p111, %p112
      %p114 = scmp.ne.s32.totalorder %s100, %s101
      %p115 = scmp.eq.s32.totalorder %s23, 1
      %p116 = por %p114, %p115
      %p118 = scmp.ne.s32.totalorder %s101, %s117
      %p119 = scmp.eq.s32.totalorder %s23, 0
      %p120 = por %p118, %p119
      %p121 = scmp.le.s32.totalorder 1, %s17
      %p122 = scmp.lt.s32.totalorder %s17, 3
      %p123 = pnand %p121, %p122
      %p124 = pneg %p123
      // Predicated region
      $region9: #{tpu_custom_call.1} parent=5 // pred_check
        _
      $region10: #{tpu_custom_call.1} parent=5 // pred_check_branch
        %126 = sbr.rel (%p123) target = $region12
      $region11: #{tpu_custom_call.1} parent=5 // pred_region
        %s127 = ssub.s32 %s17, 1
      $region12: #{tpu_custom_call.1} parent=5 // pred_fallthru
        _
      %p128 = scmp.lt.s32.totalorder %s17, 2
      // Predicated region
      $region13: #{tpu_custom_call.1} parent=5 // pred_check
        %p129 = pneg %p128
      $region14: #{tpu_custom_call.1} parent=5 // pred_check_branch
        %131 = sbr.rel (%p129) target = $region16
      $region15: #{tpu_custom_call.1} parent=5 // pred_region
        // Predicated region
        $region17: #{tpu_custom_call.1} parent=15 // pred_check
          %p132 = pneg %p51
        $region18: #{tpu_custom_call.1} parent=15 // pred_check_branch
          %134 = sbr.rel (%p132) target = $region20
        $region19: #{tpu_custom_call.1} parent=15 // pred_region
          %s135 = sand.u32 %s41, 1
          %s136 = scalar_lea.sflag [#allocation3], %s135
          %s137 = sand.u32 %s41, 1
          %s138 = smul.addr %s137, 2
          %s139 = scalar_lea.vmem [#allocation2], %s138
          %s140 = smul.u32 2, %s25
          %142 = vsyncadd %s136, 0
          %s143 = smul.addr %s24, 2
          %s144 = sadd.s32 %s140, %s143
          %s145 = scalar_lea.hbm %s0, %s144
          %s147 = sshll.u32 %s145, 4
          %s148 = int_to_ptr.hbm [resolvable:$true] %s147
          %s149 = sshll.u32 %s139, 4
          %s150 = int_to_ptr.vmem [resolvable:$true] %s149
          %152 = dma.hbm_to_vmem [thread:$0]  %s148, 32, %s150, %s136
        $region20: #{tpu_custom_call.1} parent=15 // pred_fallthru
          _
        // Predicated region
        $region21: #{tpu_custom_call.1} parent=15 // pred_check
          %p153 = pneg %p79
        $region22: #{tpu_custom_call.1} parent=15 // pred_check_branch
          %155 = sbr.rel (%p153) target = $region24
        $region23: #{tpu_custom_call.1} parent=15 // pred_region
          %s156 = sand.u32 %s69, 1
          %s157 = scalar_lea.sflag [#allocation6], %s156
          %s158 = sand.u32 %s69, 1
          %s159 = smul.addr %s158, 8
          %s160 = scalar_lea.vmem [#allocation5], %s159
          %s161 = smul.u32 2, %s25
          %163 = vsyncadd %s157, 0
          %s164 = smul.addr %s24, 2
          %s165 = sadd.s32 %s161, %s164
          %s166 = smul.addr %s165, 4
          %s167 = scalar_lea.hbm %s1, %s166
          %s169 = sshll.u32 %s167, 4
          %s170 = int_to_ptr.hbm [resolvable:$true] %s169
          %s171 = sshll.u32 %s160, 4
          %s172 = int_to_ptr.vmem [resolvable:$true] %s171
          %174 = dma.hbm_to_vmem [thread:$0]  %s170, 128, %s172, %s157
        $region24: #{tpu_custom_call.1} parent=15 // pred_fallthru
          _
      $region16: #{tpu_custom_call.1} parent=5 // pred_fallthru
        _
      %p175 = scmp.le.s32.totalorder 1, %s17
      %p176 = scmp.lt.s32.totalorder %s17, 3
      %p177 = pnand %p175, %p176
      %p178 = pneg %p177
      // Predicated region
      $region25: #{tpu_custom_call.1} parent=5 // pred_check
        _
      $region26: #{tpu_custom_call.1} parent=5 // pred_check_branch
        %180 = sbr.rel (%p177) target = $region28
      $region27: #{tpu_custom_call.1} parent=5 // pred_region
        %s181 = ssub.s32 %s17, 1
        %s182 = sand.u32 %s44, 1
        %s183 = scalar_lea.sflag [#allocation3], %s182
        %s184 = sand.u32 %s44, 1
        %s185 = smul.addr %s184, 2
        %s186 = scalar_lea.vmem [#allocation2], %s185
        // Predicated region
        $region29: #{tpu_custom_call.1} parent=27 // pred_check
          %p187 = pneg %p57
        $region30: #{tpu_custom_call.1} parent=27 // pred_check_branch
          %189 = sbr.rel (%p187) target = $region32
        $region31: #{tpu_custom_call.1} parent=27 // pred_region
          %191 = dma.done %s183, 32
        $region32: #{tpu_custom_call.1} parent=27 // pred_fallthru
          _
        %s192 = sand.u32 %s72, 1
        %s193 = scalar_lea.sflag [#allocation6], %s192
        %s194 = sand.u32 %s72, 1
        %s195 = smul.addr %s194, 8
        %s196 = scalar_lea.vmem [#allocation5], %s195
        // Predicated region
        $region33: #{tpu_custom_call.1} parent=27 // pred_check
          %p197 = pneg %p85
        $region34: #{tpu_custom_call.1} parent=27 // pred_check_branch
          %199 = sbr.rel (%p197) target = $region36
        $region35: #{tpu_custom_call.1} parent=27 // pred_region
          %201 = dma.done %s193, 128
        $region36: #{tpu_custom_call.1} parent=27 // pred_fallthru
          _
        %s202 = sand.u32 %s44, 1
        %s203 = scalar_lea.sflag [#allocation3], %s202
        %s204 = sand.u32 %s44, 1
        %s205 = smul.addr %s204, 2
        %s206 = scalar_lea.vmem [#allocation2], %s205
        %p207 = pneg %p57
        %p208 = pneg %p54
        %s209 = sand.u32 %s72, 1
        %s210 = scalar_lea.sflag [#allocation6], %s209
        %s211 = sand.u32 %s72, 1
        %s212 = smul.addr %s211, 8
        %s213 = scalar_lea.vmem [#allocation5], %s212
        %p214 = pneg %p85
        %p215 = pneg %p82
        %p216 = pneg %p113
        %p217 = pneg %p110
        %s218 = sand.u32 %s100, 1
        %s219 = scalar_lea.sflag [#allocation4], %s218
        %s220 = sand.u32 %s100, 1
        %s221 = smul.addr %s220, 8
        %s222 = scalar_lea.vmem [#allocation7], %s221
        %s223 = smul.u32 2, %s27
        %s224 = smul.u32 2, %s27
        %s225 = smul.u32 2, %s27
        %v226 = vld [vmem:[%s186] sm:$0x3]
        %v227 = vadd.s32 %v226, 2147483648
        %vm229 = vcmp.lt.s32.totalorder %v227, 3221225472
        %v230 = vld [vmem:[%s196] sm:$0xff]
        %v231 = vsel %vm229, 1, 0
        %v232 = vperm.slane %v231, 0
        %v233 = vperm.slane %v231, 1
        %vm234 = vcmp.eq.s32.totalorder %v232, 1
        %vm235 = vcmp.eq.s32.totalorder %v233, 1
        %237 = vst [vmem:[#allocation1] ss:$2 sm:$0xff] %v230
        %v238 = vld.sshfl [vmem:[#allocation1] sm:$0xff pattern:$0x75316420]
        %v239 = vld.sshfl [vmem:[#allocation1 + $0x8] sm:$0xff pattern:$0x75316420]
        %v242 = vsel %vm234, 0.0, %v238
        %v243 = vsel %vm235, 0.0, %v239
        %v246 = vrot.slane %v243, 4
        %vm247 = vcmask 1043456
        %v248 = vsel %vm247, %v242, %v246
        %250 = vst [vmem:[%s222] sm:$0xff] %v248
        %s251 = sand.u32 %s100, 1
        %s252 = scalar_lea.sflag [#allocation4], %s251
        %s253 = sand.u32 %s100, 1
        %s254 = smul.addr %s253, 8
        %s255 = scalar_lea.vmem [#allocation7], %s254
        // Predicated region
        $region37: #{tpu_custom_call.1} parent=27 // pred_check
          %p256 = pneg %p110
        $region38: #{tpu_custom_call.1} parent=27 // pred_check_branch
          %258 = sbr.rel (%p256) target = $region40
        $region39: #{tpu_custom_call.1} parent=27 // pred_region
          %s259 = smul.u32 2, %s27
          %261 = vsyncadd %s252, 0
          %s262 = smul.addr %s26, 2
          %s263 = sadd.s32 %s259, %s262
          %s264 = smul.addr %s263, 4
          %s265 = scalar_lea.hbm %s2, %s264
          %s267 = sshll.u32 %s255, 4
          %s268 = int_to_ptr.vmem [resolvable:$true] %s267
          %s269 = sshll.u32 %s265, 4
          %s270 = int_to_ptr.hbm [resolvable:$true] %s269
          %272 = dma.vmem_to_hbm [thread:$0]  %s268, 128, %s270, %s252
        $region40: #{tpu_custom_call.1} parent=27 // pred_fallthru
          _
      $region28: #{tpu_custom_call.1} parent=5 // pred_fallthru
        _
      %p273 = scmp.le.s32.totalorder 2, %s17
      // Predicated region
      $region41: #{tpu_custom_call.1} parent=5 // pred_check
        %p274 = pneg %p273
      $region42: #{tpu_custom_call.1} parent=5 // pred_check_branch
        %276 = sbr.rel (%p274) target = $region44
      $region43: #{tpu_custom_call.1} parent=5 // pred_region
        %s277 = ssub.s32 %s17, 2
        // Predicated region
        $region45: #{tpu_custom_call.1} parent=43 // pred_check
          %p278 = pneg %p116
        $region46: #{tpu_custom_call.1} parent=43 // pred_check_branch
          %280 = sbr.rel (%p278) target = $region48
        $region47: #{tpu_custom_call.1} parent=43 // pred_region
          %s281 = sand.u32 %s101, 1
          %s282 = scalar_lea.sflag [#allocation4], %s281
          %s283 = sand.u32 %s101, 1
          %s284 = smul.addr %s283, 8
          %s285 = scalar_lea.vmem [#allocation7], %s284
          %287 = dma.done %s282, 128
        $region48: #{tpu_custom_call.1} parent=43 // pred_fallthru
          _
      $region44: #{tpu_custom_call.1} parent=5 // pred_fallthru
        _
    $region6: #{tpu_custom_call.1} parent=1 // loop_footer
      %s21 = sadd.s32 1, %s17
    $region7: #{tpu_custom_call.1} parent=1 // loop_footer_branch
      %16 = sbr.rel target = $region3
    $region8: #{tpu_custom_call.1} parent=1 // loop_exit
      _
    %288 = vsyncpa [#allocation3], 1
    %s289 = scalar_lea.sflag [#allocation3], 1
    %290 = vsyncpa %s289, 1
    %291 = vsyncpa [#allocation6], 1
    %s292 = scalar_lea.sflag [#allocation6], 1
    %293 = vsyncpa %s292, 1
    %294 = vsyncpa [#allocation4], 1
    %s295 = scalar_lea.sflag [#allocation4], 1
    %296 = vsyncpa %s295, 1

</llo_original>
